<compile_context>
chip_gen: v7x
topology: tpu7x:2x2x1
jax: 0.10.0
libtpu: 0.0.40
codegen_flags: <defaults>
</compile_context>

<pallas_src>
import functools
from typing import NamedTuple, Optional

import jax
import jax.numpy as jnp
from jax.experimental import pallas as pl
from jax.experimental.pallas import tpu as pltpu

_LANES = 128


class _Config(NamedTuple):
    block_bytes: int            # per-input VMEM block budget
    vmem_limit: Optional[int]   # scoped-VMEM limit to request (None = default)
    even_grid: bool             # prefer an even grid-step count (2-TC chips)
    buffers: int                # pipeline depth for the input streams


def _device_config() -> _Config:
    """Per-generation streaming configuration (chosen at trace time)."""
    try:
        kind = jax.devices()[0].device_kind.lower()
    except Exception:  # pragma: no cover - defensive
        kind = ""
    if "v6" in kind:
        # v6e: 128 MiB physical VMEM.  6 MiB blocks, double-buffered:
        # 3 streams x 2 bufs x 6 MiB = 36 MiB scoped VMEM (limit raised).
        # Worth sweeping buffers=3 here (adds 12 MiB) for a few % more.
        return _Config(block_bytes=6 << 20, vmem_limit=64 << 20,
                       even_grid=False, buffers=2)
    if "7" in kind:
        # v7x: 64 MiB VMEM per TensorCore, 2 TCs/chip.  6 MiB blocks cut the
        # ~0.35 us/step pipeline overhead to ~5-7% at 3.2 TB/s; keep headroom
        # under 64 MiB.  Even grid-step count balances the two TensorCores.
        return _Config(block_bytes=6 << 20, vmem_limit=40 << 20,
                       even_grid=True, buffers=2)
    # v5e (and unknown chips): 2 MiB blocks -> 3 streams x 2 bufs = 12 MiB,
    # inside the 16 MiB scoped-VMEM default; bigger blocks gain <2% there.
    return _Config(block_bytes=2 << 20, vmem_limit=None,
                   even_grid=False, buffers=2)


def _mul_kernel(x_ref, w_ref, o_ref):
    # Whole-tile elementwise multiply on VMEM-resident blocks (VPU work).
    # The cast makes mixed-dtype inputs store in the promoted output dtype.
    o_ref[...] = (x_ref[...] * w_ref[...]).astype(o_ref.dtype)


def _in_spec(block, index_map, buffers):
    """Input BlockSpec; optionally deeper-than-double buffering."""
    if buffers > 2 and hasattr(pl, "Buffered"):
        try:
            return pl.BlockSpec(block, index_map,
                                pipeline_mode=pl.Buffered(buffers))
        except TypeError:  # older BlockSpec signature
            pass
    return pl.BlockSpec(block, index_map)


def _pick_tile_rows(rows: int, itemsize: int, block_bytes: int,
                    even_grid: bool) -> int:
    """Rows per (tile_r, 128) block: a sublane multiple that fits the
    per-input VMEM budget; on 2-TC chips (v7x) prefer an even number of grid
    steps so both TensorCores get equal work.  Single-TC chips take the
    single largest block that fits (no pointless extra pipeline steps)."""
    sub = max(8, 32 // itemsize)                       # 8 f32 / 16 bf16 / 32 i8
    max_tile = max(sub, (block_bytes // (_LANES * itemsize)) // sub * sub)
    if rows <= sub:
        return rows
    if rows <= max_tile:
        if not even_grid:
            return rows                                # one full-extent block
        half = -(-rows // 2)                           # v7x: exactly 2 steps
        return max(sub, -(-half // sub) * sub)
    if not even_grid:
        return max_tile
    steps = -(-rows // max_tile)
    if steps % 2 == 0 or steps >= 16:                  # imbalance negligible
        return max_tile
    for cand in range(max_tile, sub - 1, -sub):        # best-effort even count
        if (-(-rows // cand)) % 2 == 0:
            return cand
    return max_tile


def _odd_total(x, weight, out_dtype, cfg, itemsize, cost):
    """total % 128 != 0: run directly on the original-shape arrays so the
    wrapper adds zero pad/slice/concatenate HBM passes.  The ragged tail is
    handled in-kernel via full-extent / Pallas-masked partial blocks."""
    nbytes = x.size * itemsize
    # (a) Small enough for a single whole-array VMEM block.
    if nbytes <= cfg.block_bytes:
        return pl.pallas_call(
            _mul_kernel,
            out_shape=jax.ShapeDtypeStruct(x.shape, out_dtype),
            cost_estimate=cost,
        )(x, weight)
    # (b) >= 2-D: keep the last dim at full extent, tile the second-to-last
    #     dim in sublane multiples (ragged last block masked by Pallas) and
    #     step one-at-a-time over any leading dims.
    if x.ndim >= 2 and 8 * x.shape[-1] * itemsize <= cfg.block_bytes:
        lead = x.shape[:-2]
        r_dim, c_dim = x.shape[-2], x.shape[-1]
        max_r = max(8, (cfg.block_bytes // (c_dim * itemsize)) // 8 * 8)
        tile_r = r_dim if r_dim <= max_r else max_r
        block = (1,) * len(lead) + (tile_r, c_dim)
        grid = lead + (pl.cdiv(r_dim, tile_r),)
        imap = lambda *idx: (*idx, 0)
        return pl.pallas_call(
            _mul_kernel,
            out_shape=jax.ShapeDtypeStruct(x.shape, out_dtype),
            grid_spec=pltpu.PrefetchScalarGridSpec(
                num_scalar_prefetch=0,
                grid=grid,
                in_specs=[_in_spec(block, imap, cfg.buffers),
                          _in_spec(block, imap, cfg.buffers)],
                out_specs=pl.BlockSpec(block, imap),
            ),
            compiler_params=pltpu.CompilerParams(
                dimension_semantics=("parallel",) * len(grid),
                vmem_limit_bytes=cfg.vmem_limit,
            ),
            cost_estimate=cost,
        )(x, weight)
    # (c) Pathological (huge odd 1-D array / last dim too wide for VMEM):
    #     plain XLA elementwise is already at the HBM roofline.
    # TODO(synk): cover this with a manual-DMA ragged kernel if it ever matters.
    return (x * weight).astype(out_dtype)


@functools.partial(jax.jit, static_argnames=("donate_x",))
def custom_linear(x: jax.Array, weight: jax.Array, *,
                  donate_x: bool = False) -> jax.Array:
    """CustomLinear.forward: elementwise x * weight as a Pallas TPU kernel.

    Set `donate_x=True` (and donate x in the caller's jit) to alias x's HBM
    buffer with the output, saving one full-size allocation.
    """
    assert x.shape == weight.shape, "CustomLinear uses weight.shape == x.shape"
    orig_shape = x.shape
    total = x.size
    out_dtype = jnp.promote_types(x.dtype, weight.dtype)
    if total == 0:
        return (x * weight).astype(out_dtype)

    cfg = _device_config()
    itemsize = max(jnp.dtype(x.dtype).itemsize,
                   jnp.dtype(weight.dtype).itemsize,
                   jnp.dtype(out_dtype).itemsize)
    bytes_accessed = total * (jnp.dtype(x.dtype).itemsize
                              + jnp.dtype(weight.dtype).itemsize
                              + jnp.dtype(out_dtype).itemsize)
    cost = pl.CostEstimate(flops=total, transcendentals=0,
                           bytes_accessed=bytes_accessed)

    if total % _LANES != 0:
        return _odd_total(x, weight, out_dtype, cfg, itemsize, cost)

    # --- Main path: lane-dense (rows, 128) streaming -------------------------
    rows = total // _LANES
    x2 = x.reshape(rows, _LANES)          # free view under jit (128-divisible)
    w2 = weight.reshape(rows, _LANES)
    tile_r = _pick_tile_rows(rows, itemsize, cfg.block_bytes, cfg.even_grid)
    grid = (pl.cdiv(rows, tile_r),)
    alias = {0: 0} if (donate_x and out_dtype == x.dtype) else {}

    out2 = pl.pallas_call(
        _mul_kernel,
        out_shape=jax.ShapeDtypeStruct((rows, _LANES), out_dtype),
        grid_spec=pltpu.PrefetchScalarGridSpec(
            num_scalar_prefetch=0,
            grid=grid,
            in_specs=[
                _in_spec((tile_r, _LANES), lambda i: (i, 0), cfg.buffers),
                _in_spec((tile_r, _LANES), lambda i: (i, 0), cfg.buffers),
            ],
            out_specs=pl.BlockSpec((tile_r, _LANES), lambda i: (i, 0)),
        ),
        compiler_params=pltpu.CompilerParams(
            dimension_semantics=("parallel",),
            vmem_limit_bytes=cfg.vmem_limit,
        ),
        cost_estimate=cost,
        input_output_aliases=alias,
    )(x2, w2)
    return out2.reshape(orig_shape)


# TODO(synk): CustomLinear.update (masked in-place weight update) is a
# training-time helper, not part of forward; not implemented here.


if __name__ == "__main__":
    key = jax.random.PRNGKey(0)
    kx, kw, kx2, kw2, kx3, kw3 = jax.random.split(key, 6)

    # NCHW inputs matching the PyTorch module's usage (128-divisible total).
    B, C, H, W = 2, 4, 16, 16
    x = jax.random.normal(kx, (B, C, H, W), dtype=jnp.float32)
    weight = jax.random.normal(kw, (B, C, H, W), dtype=jnp.float32)
    out = jax.block_until_ready(custom_linear(x, weight))
    ref = x * weight
    assert out.shape == ref.shape and out.dtype == ref.dtype
    assert jnp.allclose(out, ref, atol=1e-6, rtol=1e-6)

    # Non-128-divisible total: handled fully in-kernel (no pad/slice/concat).
    x_odd = jax.random.normal(kx2, (2, 3, 5, 7), dtype=jnp.float32)
    w_odd = jax.random.normal(kw2, (2, 3, 5, 7), dtype=jnp.float32)
    out_odd = jax.block_until_ready(custom_linear(x_odd, w_odd))
    assert out_odd.shape == x_odd.shape
    assert jnp.allclose(out_odd, x_odd * w_odd, atol=1e-6, rtol=1e-6)

    # Mixed dtypes promote like torch's x.mul(weight): bf16 * f32 -> f32.
    x_bf = jax.random.normal(kx3, (2, 4, 16, 16), dtype=jnp.bfloat16)
    w_f32 = jax.random.normal(kw3, (2, 4, 16, 16), dtype=jnp.float32)
    out_mix = jax.block_until_ready(custom_linear(x_bf, w_f32))
    ref_mix = x_bf.astype(jnp.float32) * w_f32
    assert out_mix.dtype == ref_mix.dtype
    assert jnp.allclose(out_mix, ref_mix, atol=1e-3, rtol=1e-3)

    print("KERNEL_OK")
</pallas_src>

<mosaic_0001>
module attributes {stable_mosaic.version = 11 : i64} {
  func.func @_mul_kernel(%arg0: i32, %arg1: memref<16x128xf32, #tpu.memory_space<vmem>>, %arg2: memref<16x128xf32, #tpu.memory_space<vmem>>, %arg3: memref<16x128xf32, #tpu.memory_space<vmem>>) attributes {dimension_semantics = [#tpu.dimension_semantics<parallel>], iteration_bounds = array<i64: 1>, scalar_prefetch = 0 : i64, scratch_operands = 0 : i64, tpu.core_type = #tpu.core_type<tc>, window_params = [{transform_indices = @transform_0, window_bounds = array<i64: 16, 128>}, {transform_indices = @transform_1, window_bounds = array<i64: 16, 128>}, {transform_indices = @transform_2, window_bounds = array<i64: 16, 128>}]} {
    %c0 = arith.constant 0 : index
    %c0_0 = arith.constant 0 : index
    %0 = vector.load %arg1[%c0, %c0_0] : memref<16x128xf32, #tpu.memory_space<vmem>>, vector<16x128xf32>
    %c0_1 = arith.constant 0 : index
    %c0_2 = arith.constant 0 : index
    %1 = vector.load %arg2[%c0_1, %c0_2] : memref<16x128xf32, #tpu.memory_space<vmem>>, vector<16x128xf32>
    %2 = arith.mulf %0, %1 : vector<16x128xf32>
    %c0_3 = arith.constant 0 : index
    %c0_4 = arith.constant 0 : index
    %3 = vector.load %arg3[%c0_3, %c0_4] : memref<16x128xf32, #tpu.memory_space<vmem>>, vector<16x128xf32>
    tpu.vector_store %arg3[%c0_3, %c0_4], %2 {strides = array<i32>} : memref<16x128xf32, #tpu.memory_space<vmem>>, vector<16x128xf32>,
    return
  }
  func.func @transform_0(%arg0: i32) -> (i32, i32) {
    %c0_i32 = arith.constant 0 : i32
    %c0_i32_0 = arith.constant 0 : i32
    return %arg0, %c0_i32 : i32, i32
  }
  func.func @transform_1(%arg0: i32) -> (i32, i32) {
    %c0_i32 = arith.constant 0 : i32
    %c0_i32_0 = arith.constant 0 : i32
    return %arg0, %c0_i32 : i32, i32
  }
  func.func @transform_2(%arg0: i32) -> (i32, i32) {
    %c0_i32 = arith.constant 0 : i32
    %c0_i32_0 = arith.constant 0 : i32
    return %arg0, %c0_i32 : i32, i32
  }
}

</mosaic_0001>

<llo_original>
// kernel: custom_linear.1
$region0: #{custom_linear.1}
  #allocation0 [shape = 'u32[]', space=smem, size = 0x4, offset = 0x4, fixed_abs, tag = 'smem constant byte address 0x4 - core index']
  #allocation1 [shape = 'u32[144,128]{1,0:T(1,128)}', space=vmem, size = 0x12000, scoped, tag = 'internal scratch']
  %s0 = inlined_call_operand.vmem [shape: f32[16,128], index: 0, kind: input, shape index: {}]
  %s1 = inlined_call_operand.vmem [shape: f32[16,128], index: 1, kind: input, shape index: {}]
  %s2 = inlined_call_operand.vmem [shape: f32[16,128], index: 2, kind: output, shape index: {}]
  %s3 = sld [smem:[#allocation0]]
  $region18: #{custom_linear.1} parent=0
    _
  %s5 = ssub.s32 1, %s3
  %s6 = scalar_select 0, %s5, %s3
  // Predicated region
  $region2: #{custom_linear.1} parent=0 // pred_check
    _
  $region3: #{custom_linear.1} parent=0 // pred_check_branch
    %8 = sbr.rel (0) target = $region5
  $region4: #{custom_linear.1} parent=0 // pred_region
    _
  $region5: #{custom_linear.1} parent=0 // pred_fallthru
    _
  // Predicated region
  $region6: #{custom_linear.1} parent=0 // pred_check
    _
  $region7: #{custom_linear.1} parent=0 // pred_check_branch
    %10 = sbr.rel (0) target = $region9
  $region8: #{custom_linear.1} parent=0 // pred_region
    _
  $region9: #{custom_linear.1} parent=0 // pred_fallthru
    _
  %v11 = vld [vmem:[%s0] sm:$0xff]
  %v12 = vld [vmem:[%s0 + $0x8] sm:$0xff]
  %v13 = vld [vmem:[%s1] sm:$0xff]
  %v14 = vld [vmem:[%s1 + $0x8] sm:$0xff]
  %v15 = vmul.f32 %v11, %v13
  %v16 = vmul.f32 %v12, %v14
  %17 = vst [vmem:[%s2] sm:$0xff] %v15
  %18 = vst [vmem:[%s2 + $0x8] sm:$0xff] %v16
  // Predicated region
  $region10: #{custom_linear.1} parent=0 // pred_check
    _
  $region11: #{custom_linear.1} parent=0 // pred_check_branch
    %20 = sbr.rel (0) target = $region13
  $region12: #{custom_linear.1} parent=0 // pred_region
    _
  $region13: #{custom_linear.1} parent=0 // pred_fallthru
    _
  // Predicated region
  $region14: #{custom_linear.1} parent=0 // pred_check
    _
  $region15: #{custom_linear.1} parent=0 // pred_check_branch
    %22 = sbr.rel (0) target = $region17
  $region16: #{custom_linear.1} parent=0 // pred_region
    _
  $region17: #{custom_linear.1} parent=0 // pred_fallthru
    _

</llo_original>
